<compile_context>
chip_gen: v6e
topology: v6e:2x2x1
jax: 0.10.0
libtpu: 0.0.40
codegen_flags: <defaults>
</compile_context>

<pallas_src>
import functools

import jax
import jax.numpy as jnp
from jax.experimental import pallas as pl
from jax.experimental.pallas import tpu as pltpu


def _round_up(x: int, m: int) -> int:
    return ((x + m - 1) // m) * m


def _pick_tile(n_aligned: int, requested: int, align: int) -> tuple[int, int]:
    """Pick a tile for an axis of (already `align`-aligned) extent `n_aligned`.

    Prefers the largest multiple of `align` <= `requested` that divides
    `n_aligned` exactly, so the big adjacency stack needs no jnp.pad copy.
    Only if every such divisor is pathologically small (>4x below the request)
    do we fall back to padding the axis up to a multiple of the requested tile.
    Returns (tile, padded_extent).
    """
    req = max(align, min(requested, n_aligned))
    req -= req % align
    best = align
    t = req
    while t >= align:
        if n_aligned % t == 0:
            best = t
            break
        t -= align
    if best * 4 >= req:
        return best, n_aligned
    return req, _round_up(n_aligned, req)


def _gcn_edge_concat_kernel(adj_ref, xw_ref, b_ref, o_ref, *,
                            tile_k, mxu_dtype, xw_resident):
    """grid = (M row tiles [parallel], E [arbitrary], K col tiles [arbitrary]).

    adj_ref: (TM, TK)              adjacency tile (edge e, row block m, col block k)
    xw_ref:  (E, K_pad, O_pad)     if xw_resident else (TK, O_pad)
    b_ref:   (1, O_pad)            bias, lane padded (resident)
    o_ref:   (TM, O_pad)           f32 output tile, resident accumulator over (e, k)
    """
    e = pl.program_id(1)
    k = pl.program_id(2)

    @pl.when((e == 0) & (k == 0))
    def _():
        o_ref[...] = jnp.broadcast_to(b_ref[...], o_ref.shape).astype(o_ref.dtype)

    if xw_resident:
        start = pl.multiple_of(k * tile_k, tile_k)
        xw_tile = xw_ref[e, pl.ds(start, tile_k), :]
    else:
        xw_tile = xw_ref[...]

    # Feed the MXU bf16 (or f32) operands; accumulate in f32 in o_ref.  The cast
    # runs on the VPU over the VMEM tile and hides under the adjacency DMA.
    a_tile = adj_ref[...].astype(mxu_dtype)
    o_ref[...] += jnp.dot(a_tile, xw_tile.astype(mxu_dtype),
                          preferred_element_type=jnp.float32)


@functools.partial(jax.jit, static_argnames=("tm", "tk", "use_bf16", "adj_buffers"))
def gcn_edge_concat_parallel(x, adj_stack, weight, bias, *,
                             tm=1024, tk=1024, use_bf16=True, adj_buffers=2):
    """x: (N, F), adj_stack: (E, N, N), weight: (O, E*F) [PyTorch Linear layout],
    bias: (O,). Returns (N, O) float32."""
    N, F = x.shape
    E = adj_stack.shape[0]
    O = weight.shape[0]
    assert adj_stack.shape == (E, N, N)
    assert weight.shape == (O, E * F)

    mxu_dtype = jnp.bfloat16 if use_bf16 else jnp.float32

    # Adjacency is the dominant HBM term: never materialize a dtype-cast / padded
    # copy of it in the wrapper unless unavoidable.  Only non-f32/bf16/f16 inputs
    # (e.g. int or f64 adjacency) get normalized to f32 here.
    if not (jnp.issubdtype(adj_stack.dtype, jnp.floating)
            and jnp.dtype(adj_stack.dtype).itemsize <= 4):
        adj_stack = adj_stack.astype(jnp.float32)

    # Reassociated per-edge weight slabs and the tiny precompute XW_e = x @ W_e.
    w_e = weight.astype(jnp.float32).T.reshape(E, F, O)              # (E, F, O)
    xw = jnp.einsum("nf,efo->eno", x.astype(jnp.float32), w_e,
                    preferred_element_type=jnp.float32)              # (E, N, O)
    xw = xw.astype(mxu_dtype)

    # ---- Tiling -----------------------------------------------------------
    n_al_m = _round_up(N, 8)      # sublane alignment of adjacency rows
    n_al_k = _round_up(N, 128)    # lane alignment of adjacency cols
    o_pad = _round_up(O, 128)     # lane-dense output width

    # Keep >= 2 row tiles when the graph is big enough so the "parallel" m axis
    # spans both TensorCores on v7x (single-TC v5e/v6e unaffected).
    req_m = tm
    if n_al_m >= 512:
        req_m = min(req_m, max(256, (n_al_m // 2) // 8 * 8))
    tile_m, n_pad_m = _pick_tile(n_al_m, req_m, 8)
    tile_k, n_pad_k = _pick_tile(n_al_k, tk, 128)

    adj_in = adj_stack
    if (n_pad_m, n_pad_k) != (N, N):
        # Only taken when N is not tile-divisible; normally skipped entirely so
        # the kernel reads the original adjacency straight from HBM.
        adj_in = jnp.pad(adj_stack, ((0, 0), (0, n_pad_m - N), (0, n_pad_k - N)))
    xw_p = jnp.pad(xw, ((0, 0), (0, n_pad_k - N), (0, o_pad - O)))
    b_p = jnp.pad(bias.astype(jnp.float32), (0, o_pad - O)).reshape(1, o_pad)

    grid_m = n_pad_m // tile_m
    grid_k = n_pad_k // tile_k
    grid = (grid_m, E, grid_k)

    # ---- VMEM budget / XW residency ----------------------------------------
    adj_itemsize = jnp.dtype(adj_in.dtype).itemsize
    xw_itemsize = jnp.dtype(xw_p.dtype).itemsize
    adj_tile_bytes = tile_m * tile_k * adj_itemsize
    out_tile_bytes = tile_m * o_pad * 4
    xw_full_bytes = E * n_pad_k * o_pad * xw_itemsize
    xw_tile_bytes = tile_k * o_pad * xw_itemsize

    vmem_budget = 40 * 1024 * 1024   # conservative across v5e/v6e/v7x (64 MiB phys)
    base_bytes = (adj_tile_bytes * max(2, adj_buffers)
                  + out_tile_bytes * 2 + o_pad * 4 * 2)
    # Make XW fully VMEM-resident when it fits: removes its per-row-tile
    # re-streaming from HBM entirely and frees a double buffer.
    xw_resident = base_bytes + 2 * xw_full_bytes <= vmem_budget

    if xw_resident:
        xw_spec = pl.BlockSpec((E, n_pad_k, o_pad), lambda m, e, k: (0, 0, 0))
        vmem_est = base_bytes + 2 * xw_full_bytes
        xw_hbm_bytes = xw_full_bytes
    else:
        xw_spec = pl.BlockSpec((pl.Squeezed(), tile_k, o_pad),
                               lambda m, e, k: (e, k, 0))
        vmem_est = base_bytes + 2 * xw_tile_bytes
        xw_hbm_bytes = xw_full_bytes * grid_m   # re-streamed once per row tile

    adj_spec_kwargs = {}
    if adj_buffers != 2:
        # Deeper pipelining of the adjacency stream (e.g. 3 on v7x if the DMA is
        # exposed after the bf16 switch); costs one extra adj tile of VMEM.
        adj_spec_kwargs["pipeline_mode"] = pl.Buffered(adj_buffers)
    adj_spec = pl.BlockSpec((pl.Squeezed(), tile_m, tile_k),
                            lambda m, e, k: (e, m, k), **adj_spec_kwargs)

    vmem_limit = int(min(48 * 1024 * 1024, max(32 * 1024 * 1024, 2 * vmem_est)))

    cost = pl.CostEstimate(
        flops=2 * E * n_pad_m * n_pad_k * o_pad,
        bytes_accessed=(E * n_pad_m * n_pad_k * adj_itemsize
                        + xw_hbm_bytes + n_pad_m * o_pad * 4 + o_pad * 4),
        transcendentals=0,
    )

    kernel = functools.partial(_gcn_edge_concat_kernel, tile_k=tile_k,
                               mxu_dtype=mxu_dtype, xw_resident=xw_resident)

    out_p = pl.pallas_call(
        kernel,
        out_shape=jax.ShapeDtypeStruct((n_pad_m, o_pad), jnp.float32),
        grid_spec=pltpu.PrefetchScalarGridSpec(
            num_scalar_prefetch=0,
            grid=grid,
            in_specs=[
                adj_spec,                                   # adjacency tile stream
                xw_spec,                                    # resident or streamed XW
                pl.BlockSpec((1, o_pad), lambda m, e, k: (0, 0)),   # bias (resident)
            ],
            # Output block index depends only on m -> resident f32 accumulator
            # across the (e, k) reduction axes (kept last in the grid).
            out_specs=pl.BlockSpec((tile_m, o_pad), lambda m, e, k: (m, 0)),
        ),
        compiler_params=pltpu.CompilerParams(
            # Row-tile axis parallel (megacore on v7x); edge + contraction axes
            # are reductions and must stay "arbitrary".
            dimension_semantics=("parallel", "arbitrary", "arbitrary"),
            vmem_limit_bytes=vmem_limit,
        ),
        cost_estimate=cost,
    )(adj_in, xw_p, b_p)

    return out_p[:N, :O]


if __name__ == "__main__":
    # Small deterministic example consistent with the module.
    N = 16
    in_features = 8
    n_edge_features = 3
    out_features = 32

    key = jax.random.PRNGKey(0)
    k_x, k_a, k_w, k_b = jax.random.split(key, 4)

    x = jax.random.normal(k_x, (N, in_features), dtype=jnp.float32)
    adj_stack = jax.random.normal(k_a, (n_edge_features, N, N), dtype=jnp.float32)

    # fc1 = Linear(in_features * n_edge_features, out_features, bias=True)
    fan_in = in_features * n_edge_features
    bound = 1.0 / (fan_in ** 0.5)
    weight = jax.random.uniform(k_w, (out_features, fan_in), dtype=jnp.float32,
                                minval=-bound, maxval=bound)
    bias = jax.random.uniform(k_b, (out_features,), dtype=jnp.float32,
                              minval=-bound, maxval=bound)

    # Pure-JAX reference of the PyTorch semantics.
    support = jnp.concatenate([adj_stack[e] @ x for e in range(n_edge_features)], axis=1)
    ref = support @ weight.T + bias

    # Exact f32 MXU path.
    out_f32 = jax.block_until_ready(
        gcn_edge_concat_parallel(x, adj_stack, weight, bias, use_bf16=False))
    assert out_f32.shape == (N, out_features)
    assert jnp.allclose(out_f32, ref, atol=1e-3, rtol=1e-3)

    # Default bf16-MXU / f32-accumulate path (looser tolerance).
    out_bf16 = jax.block_until_ready(
        gcn_edge_concat_parallel(x, adj_stack, weight, bias))
    assert jnp.allclose(out_bf16, ref, atol=5e-2, rtol=5e-2)

    # Second shape: multi-tile (m, e, k) grid with no adjacency padding at all,
    # exercising the resident-XW slicing and the (e, k) accumulation order.
    N2 = 384
    k_x2, k_a2 = jax.random.split(jax.random.PRNGKey(1))
    x2 = jax.random.normal(k_x2, (N2, in_features), dtype=jnp.float32)
    adj2 = jax.random.normal(k_a2, (n_edge_features, N2, N2), dtype=jnp.float32)
    out2 = jax.block_until_ready(
        gcn_edge_concat_parallel(x2, adj2, weight, bias, tm=128, tk=128))
    support2 = jnp.concatenate([adj2[e] @ x2 for e in range(n_edge_features)], axis=1)
    ref2 = support2 @ weight.T + bias
    assert out2.shape == (N2, out_features)
    assert jnp.allclose(out2, ref2, atol=5e-1, rtol=5e-2)

    print("KERNEL_OK")
</pallas_src>

<mosaic_0001>
module attributes {stable_mosaic.version = 11 : i64} {
  func.func @_gcn_edge_concat_kernel(%arg0: i32, %arg1: i32, %arg2: i32, %arg3: memref<1x16x128xf32, #tpu.memory_space<vmem>>, %arg4: memref<3x128x128xf32, #tpu.memory_space<vmem>>, %arg5: memref<1x128xf32, #tpu.memory_space<vmem>>, %arg6: memref<16x128xf32, #tpu.memory_space<vmem>>) attributes {dimension_semantics = [#tpu.dimension_semantics<parallel>, #tpu.dimension_semantics<arbitrary>, #tpu.dimension_semantics<arbitrary>], iteration_bounds = array<i64: 1, 3, 1>, scalar_prefetch = 0 : i64, scratch_operands = 0 : i64, tpu.core_type = #tpu.core_type<tc>, window_params = [{transform_indices = @transform_0, window_bounds = array<i64: 1, 16, 128>}, {pipeline_mode = #tpu.pipeline_mode<synchronous>, transform_indices = @transform_1, window_bounds = array<i64: 3, 128, 128>}, {pipeline_mode = #tpu.pipeline_mode<synchronous>, transform_indices = @transform_2, window_bounds = array<i64: 1, 128>}, {transform_indices = @transform_3, window_bounds = array<i64: 16, 128>}]} {
    %c0_i32 = arith.constant 0 : i32
    %0 = arith.cmpi eq, %arg1, %c0_i32 : i32
    %c0_i32_0 = arith.constant 0 : i32
    %1 = arith.cmpi eq, %arg2, %c0_i32_0 : i32
    %2 = arith.andi %0, %1 : i1
    %3 = arith.extui %2 : i1 to i32
    %c0_i32_1 = arith.constant 0 : i32
    %4 = arith.cmpi ne, %3, %c0_i32_1 : i32
    scf.if %4 {
      %c0_9 = arith.constant 0 : index
      %c0_10 = arith.constant 0 : index
      %17 = vector.load %arg5[%c0_9, %c0_10] : memref<1x128xf32, #tpu.memory_space<vmem>>, vector<1x128xf32>
      %18 = vector.shape_cast %17 : vector<1x128xf32> to vector<1x128xf32>
      %19 = vector.broadcast %18 : vector<1x128xf32> to vector<16x128xf32>
      %c0_11 = arith.constant 0 : index
      %c0_12 = arith.constant 0 : index
      %20 = vector.load %arg6[%c0_11, %c0_12] : memref<16x128xf32, #tpu.memory_space<vmem>>, vector<16x128xf32>
      tpu.vector_store %arg6[%c0_11, %c0_12], %19 {strides = array<i32>} : memref<16x128xf32, #tpu.memory_space<vmem>>, vector<16x128xf32>,
    } else {
    }
    %c128_i32 = arith.constant 128 : i32
    %5 = arith.muli %arg2, %c128_i32 : i32
    %6 = tpu.assume_multiple %5, 128 : i32
    %7 = arith.index_cast %arg1 : i32 to index
    %8 = arith.index_cast %6 : i32 to index
    %c0 = arith.constant 0 : index
    %9 = vector.load %arg4[%7, %8, %c0] : memref<3x128x128xf32, #tpu.memory_space<vmem>>, vector<1x128x128xf32>
    %10 = vector.shape_cast %9 : vector<1x128x128xf32> to vector<128x128xf32>
    %c0_2 = arith.constant 0 : index
    %c0_3 = arith.constant 0 : index
    %c0_4 = arith.constant 0 : index
    %11 = vector.load %arg3[%c0_2, %c0_3, %c0_4] : memref<1x16x128xf32, #tpu.memory_space<vmem>>, vector<1x16x128xf32>
    %12 = vector.shape_cast %11 : vector<1x16x128xf32> to vector<16x128xf32>
    %c0_5 = arith.constant 0 : index
    %c0_6 = arith.constant 0 : index
    %13 = vector.load %arg6[%c0_5, %c0_6] : memref<16x128xf32, #tpu.memory_space<vmem>>, vector<16x128xf32>
    %cst = arith.constant dense<0.000000e+00> : vector<16x128xf32>
    %14 = tpu.matmul %12, %10, %cst {dimension_numbers = #tpu.dot_dimension_numbers<[1], [0], [0], [1], [0, 0, 1, 1], [], []>} : vector<16x128xf32>, vector<128x128xf32>, vector<16x128xf32> -> vector<16x128xf32>
    %15 = arith.addf %13, %14 : vector<16x128xf32>
    %c0_7 = arith.constant 0 : index
    %c0_8 = arith.constant 0 : index
    %16 = vector.load %arg6[%c0_7, %c0_8] : memref<16x128xf32, #tpu.memory_space<vmem>>, vector<16x128xf32>
    tpu.vector_store %arg6[%c0_7, %c0_8], %15 {strides = array<i32>} : memref<16x128xf32, #tpu.memory_space<vmem>>, vector<16x128xf32>,
    return
  }
  func.func @transform_0(%arg0: i32, %arg1: i32, %arg2: i32) -> (i32, i32, i32) {
    %c0_i32 = arith.constant 0 : i32
    return %arg1, %arg0, %arg2 : i32, i32, i32
  }
  func.func @transform_1(%arg0: i32, %arg1: i32, %arg2: i32) -> (i32, i32, i32) {
    %c0_i32 = arith.constant 0 : i32
    %c0_i32_0 = arith.constant 0 : i32
    %c0_i32_1 = arith.constant 0 : i32
    %c0_i32_2 = arith.constant 0 : i32
    return %c0_i32, %c0_i32_0, %c0_i32_1 : i32, i32, i32
  }
  func.func @transform_2(%arg0: i32, %arg1: i32, %arg2: i32) -> (i32, i32) {
    %c0_i32 = arith.constant 0 : i32
    %c0_i32_0 = arith.constant 0 : i32
    %c0_i32_1 = arith.constant 0 : i32
    return %c0_i32, %c0_i32_0 : i32, i32
  }
  func.func @transform_3(%arg0: i32, %arg1: i32, %arg2: i32) -> (i32, i32) {
    %c0_i32 = arith.constant 0 : i32
    %c0_i32_0 = arith.constant 0 : i32
    return %arg0, %c0_i32 : i32, i32
  }
}

</mosaic_0001>

<llo_original>
// kernel: gcn_edge_concat_parallel.1
$region0: #{gcn_edge_concat_parallel.1}
  #allocation0 [shape = 'u32[]', space=smem, size = 0x4, offset = 0x4, fixed_abs, tag = 'smem constant byte address 0x4 - core index']
  #allocation1 [shape = 'u32[144,128]{1,0:T(1,128)}', space=vmem, size = 0x12000, scoped, tag = 'internal scratch']
  %s0 = inlined_call_operand.vmem [shape: f32[3,16,128], index: 0, kind: input, shape index: {}]
  %s1 = inlined_call_operand.vmem [shape: f32[3,128,128], index: 1, kind: input, shape index: {}]
  %s2 = inlined_call_operand.vmem [shape: f32[1,128], index: 2, kind: input, shape index: {}]
  %s3 = inlined_call_operand.hbm [shape: f32[16,128], index: 3, kind: output, shape index: {}]
  %s4 = sld [smem:[#allocation0]]
  $region49: #{gcn_edge_concat_parallel.1} parent=0
    _
  %s6 = ssub.s32 1, %s4
  %s7 = scalar_select 0, %s6, %s4
  $region1: #{gcn_edge_concat_parallel.1} parent=0
    #allocation2 [shape = 'u8[8192]{0}', space=vmem, size = 0x2000, scoped, tag = 'output window, operand 0, single buffered']
    #allocation3 [shape = 's32[2]{0}', space=sflag, size = 0x8, scoped, tag = 'scoped memory for gcn_edge_concat_parallel.1']
    %8 = vsyncpa [#allocation3], 0
    loop: start=0, step=1, limit=5
    $region2: #{gcn_edge_concat_parallel.1} parent=1 // loop_pre_header
      _
    $region3: #{gcn_edge_concat_parallel.1} parent=1 // loop_header
      %s10 = sphi 0, %s14
      %p11 = scmp.ge.s32.totalorder %s10, 5
      %s17 = sphi 0, %s36
      %s18 = sphi 0, %s32
      %s19 = sphi 0, %s28
      %s20 = sphi 0, %s17
      %s21 = sphi 0, %s18
      %s22 = sphi 0, %s19
      %s23 = sphi 0, %s20
      %s24 = sphi 0, %s21
      %s25 = sphi 0, %s22
      %s43 = sphi 0, %s45
      %s46 = sphi 0, %s43
      %s47 = sphi 0, %s46
      %s63 = sphi 0, %s47
      %s67 = sphi 0, %s67
      %s69 = sphi 0, %s67
      %s70 = sphi 0, %s69
      %s84 = sphi 0, %s70
      %s88 = sphi 0, %s88
      %s90 = sphi 0, %s88
      %s91 = sphi 0, %s90
      %s105 = sphi 0, %s91
      %s111 = sphi 0, %s113
      %s114 = sphi 0, %s111
      %s115 = sphi 0, %s114
      %s131 = sphi 0, %s115
    $region4: #{gcn_edge_concat_parallel.1} parent=1 // loop_header_branch
      %13 = sbr.rel (%p11) target = $region8
    $region5: #{gcn_edge_concat_parallel.1} parent=1 // loop_body
      %s15 = ssub.s32 %s10, 1
      %s16 = ssub.s32 %s10, 2
      %s26 = sadd.s32 1, %s19
      %p27 = scmp.ge.s32.totalorder %s26, 1
      %s28 = scalar_select %p27, 0, %s26
      %s29 = sadd.s32 1, %s18
      %s30 = scalar_select %p27, %s29, %s18
      %p31 = scmp.ge.s32.totalorder %s30, 3
      %s32 = scalar_select %p31, 0, %s30
      %s33 = sadd.s32 1, %s17
      %s34 = scalar_select %p31, %s33, %s17
      %p35 = scmp.ge.s32.totalorder %s34, 1
      %s36 = scalar_select %p35, 0, %s34
      %s37 = ssub.s32 %s18, %s32
      %s38 = ssub.s32 %s17, %s36
      %s39 = sor.u32 %s37, %s38
      %s40 = ssub.s32 %s19, %s28
      %s41 = sor.u32 %s39, %s40
      %p42 = scmp.eq.s32.totalorder %s41, 0
      %s44 = sadd.s32 %s43, 1
      %s45 = scalar_select %p42, %s43, %s44
      %p48 = pneg %p42
      %p49 = scmp.eq.s32.totalorder %s10, 2
      %p50 = por %p48, %p49
      %p51 = scmp.ne.s32.totalorder %s43, %s46
      %p52 = scmp.eq.s32.totalorder %s10, 0
      %p53 = por %p51, %p52
      %p54 = scmp.ne.s32.totalorder %s43, %s46
      %p55 = scmp.eq.s32.totalorder %s15, 2
      %p56 = por %p54, %p55
      %p57 = scmp.ne.s32.totalorder %s46, %s47
      %p58 = scmp.eq.s32.totalorder %s15, 0
      %p59 = por %p57, %p58
      %p60 = scmp.ne.s32.totalorder %s46, %s47
      %p61 = scmp.eq.s32.totalorder %s16, 2
      %p62 = por %p60, %p61
      %p64 = scmp.ne.s32.totalorder %s47, %s63
      %p65 = scmp.eq.s32.totalorder %s16, 0
      %p66 = por %p64, %p65
      %s68 = sadd.s32 %s67, 1
      %p71 = scmp.eq.s32.totalorder %s10, 2
      %p72 = scmp.ne.s32.totalorder %s67, %s69
      %p73 = scmp.eq.s32.totalorder %s10, 0
      %p74 = por %p72, %p73
      %p75 = scmp.ne.s32.totalorder %s67, %s69
      %p76 = scmp.eq.s32.totalorder %s15, 2
      %p77 = por %p75, %p76
      %p78 = scmp.ne.s32.totalorder %s69, %s70
      %p79 = scmp.eq.s32.totalorder %s15, 0
      %p80 = por %p78, %p79
      %p81 = scmp.ne.s32.totalorder %s69, %s70
      %p82 = scmp.eq.s32.totalorder %s16, 2
      %p83 = por %p81, %p82
      %p85 = scmp.ne.s32.totalorder %s70, %s84
      %p86 = scmp.eq.s32.totalorder %s16, 0
      %p87 = por %p85, %p86
      %s89 = sadd.s32 %s88, 1
      %p92 = scmp.eq.s32.totalorder %s10, 2
      %p93 = scmp.ne.s32.totalorder %s88, %s90
      %p94 = scmp.eq.s32.totalorder %s10, 0
      %p95 = por %p93, %p94
      %p96 = scmp.ne.s32.totalorder %s88, %s90
      %p97 = scmp.eq.s32.totalorder %s15, 2
      %p98 = por %p96, %p97
      %p99 = scmp.ne.s32.totalorder %s90, %s91
      %p100 = scmp.eq.s32.totalorder %s15, 0
      %p101 = por %p99, %p100
      %p102 = scmp.ne.s32.totalorder %s90, %s91
      %p103 = scmp.eq.s32.totalorder %s16, 2
      %p104 = por %p102, %p103
      %p106 = scmp.ne.s32.totalorder %s91, %s105
      %p107 = scmp.eq.s32.totalorder %s16, 0
      %p108 = por %p106, %p107
      %s109 = ssub.s32 %s17, %s36
      %p110 = scmp.eq.s32.totalorder %s109, 0
      %s112 = sadd.s32 %s111, 1
      %s113 = scalar_select %p110, %s111, %s112
      %p116 = pneg %p110
      %p117 = scmp.eq.s32.totalorder %s10, 2
      %p118 = por %p116, %p117
      %p119 = scmp.ne.s32.totalorder %s111, %s114
      %p120 = scmp.eq.s32.totalorder %s10, 0
      %p121 = por %p119, %p120
      %p122 = scmp.ne.s32.totalorder %s111, %s114
      %p123 = scmp.eq.s32.totalorder %s15, 2
      %p124 = por %p122, %p123
      %p125 = scmp.ne.s32.totalorder %s114, %s115
      %p126 = scmp.eq.s32.totalorder %s15, 0
      %p127 = por %p125, %p126
      %p128 = scmp.ne.s32.totalorder %s114, %s115
      %p129 = scmp.eq.s32.totalorder %s16, 2
      %p130 = por %p128, %p129
      %p132 = scmp.ne.s32.totalorder %s115, %s131
      %p133 = scmp.eq.s32.totalorder %s16, 0
      %p134 = por %p132, %p133
      %p135 = scmp.le.s32.totalorder 1, %s10
      %p136 = scmp.lt.s32.totalorder %s10, 4
      %p137 = pnand %p135, %p136
      %p138 = pneg %p137
      // Predicated region
      $region9: #{gcn_edge_concat_parallel.1} parent=5 // pred_check
        _
      $region10: #{gcn_edge_concat_parallel.1} parent=5 // pred_check_branch
        %140 = sbr.rel (%p137) target = $region12
      $region11: #{gcn_edge_concat_parallel.1} parent=5 // pred_region
        %s141 = ssub.s32 %s10, 1
        // Predicated region
        $region13: #{gcn_edge_concat_parallel.1} parent=11 // pred_check
          %p142 = pneg %p80
        $region14: #{gcn_edge_concat_parallel.1} parent=11 // pred_check_branch
          %144 = sbr.rel (%p142) target = $region16
        $region15: #{gcn_edge_concat_parallel.1} parent=11 // pred_region
          _
        $region16: #{gcn_edge_concat_parallel.1} parent=11 // pred_fallthru
          _
        // Predicated region
        $region17: #{gcn_edge_concat_parallel.1} parent=11 // pred_check
          %p145 = pneg %p101
        $region18: #{gcn_edge_concat_parallel.1} parent=11 // pred_check_branch
          %147 = sbr.rel (%p145) target = $region20
        $region19: #{gcn_edge_concat_parallel.1} parent=11 // pred_region
          _
        $region20: #{gcn_edge_concat_parallel.1} parent=11 // pred_fallthru
          _
      $region12: #{gcn_edge_concat_parallel.1} parent=5 // pred_fallthru
        _
      %p148 = scmp.lt.s32.totalorder %s10, 3
      // Predicated region
      $region21: #{gcn_edge_concat_parallel.1} parent=5 // pred_check
        %p149 = pneg %p148
      $region22: #{gcn_edge_concat_parallel.1} parent=5 // pred_check_branch
        %151 = sbr.rel (%p149) target = $region24
      $region23: #{gcn_edge_concat_parallel.1} parent=5 // pred_region
        // Predicated region
        $region25: #{gcn_edge_concat_parallel.1} parent=23 // pred_check
          %p152 = pneg %p53
        $region26: #{gcn_edge_concat_parallel.1} parent=23 // pred_check_branch
          %154 = sbr.rel (%p152) target = $region28
        $region27: #{gcn_edge_concat_parallel.1} parent=23 // pred_region
          %s155 = smul.u32 2, %s17
          %p156 = scmp.lt.s32.totalorder %s18, 2
          %s157 = scalar_select %p156, %s18, 2
          %p158 = scmp.lt.s32.totalorder %s155, 1
          %s159 = scalar_select %p158, %s155, 1
          %p160 = scmp.lt.s32.totalorder %s19, 0
          %s161 = scalar_select %p160, %s19, 0
          %s162 = sadd.s32 %s161, %s159
          %s163 = smul.addr %s157, 2
          %s164 = sadd.s32 %s162, %s163
          %s165 = smul.addr %s164, 8
          %s166 = scalar_lea.vmem %s0, %s165
          %s167 = smul.u32 2, %s17
        $region28: #{gcn_edge_concat_parallel.1} parent=23 // pred_fallthru
          _
      $region24: #{gcn_edge_concat_parallel.1} parent=5 // pred_fallthru
        _
      %p168 = scmp.le.s32.totalorder 1, %s10
      %p169 = scmp.lt.s32.totalorder %s10, 4
      %p170 = pnand %p168, %p169
      %p171 = pneg %p170
      // Predicated region
      $region29: #{gcn_edge_concat_parallel.1} parent=5 // pred_check
        _
      $region30: #{gcn_edge_concat_parallel.1} parent=5 // pred_check_branch
        %173 = sbr.rel (%p170) target = $region32
      $region31: #{gcn_edge_concat_parallel.1} parent=5 // pred_region
        %s174 = ssub.s32 %s10, 1
        %s175 = smul.u32 2, %s20
        %p176 = scmp.lt.s32.totalorder %s21, 2
        %s177 = scalar_select %p176, %s21, 2
        %p178 = scmp.lt.s32.totalorder %s175, 1
        %s179 = scalar_select %p178, %s175, 1
        %p180 = scmp.lt.s32.totalorder %s22, 0
        %s181 = scalar_select %p180, %s22, 0
        %s182 = sadd.s32 %s181, %s179
        %s183 = smul.addr %s177, 2
        %s184 = sadd.s32 %s182, %s183
        %s185 = smul.addr %s184, 8
        %s186 = scalar_lea.vmem %s0, %s185
        %p187 = pneg %p59
        %p188 = pneg %p56
        %p189 = pneg %p80
        %p190 = pneg %p77
        %p191 = pneg %p101
        %p192 = pneg %p98
        %p193 = pneg %p127
        %p194 = pneg %p124
        %s195 = smul.u32 2, %s20
        %p196 = scmp.lt.s32.totalorder %s21, 2
        %s197 = scalar_select %p196, %s21, 2
        %p198 = scmp.lt.s32.totalorder %s195, 1
        %s199 = scalar_select %p198, %s195, 1
        %p200 = scmp.lt.s32.totalorder %s22, 0
        %s201 = scalar_select %p200, %s22, 0
        %s202 = sadd.s32 %s201, %s199
        %s203 = smul.addr %s197, 2
        %s204 = sadd.s32 %s202, %s203
        %s205 = smul.addr %s204, 8
        %s206 = scalar_lea.vmem %s0, %s205
        %s207 = smul.u32 2, %s20
        %s208 = smul.u32 2, %s20
        %p209 = scmp.eq.s32.totalorder %s21, 0
        %p210 = scmp.eq.s32.totalorder %s22, 0
        %p211 = pnand %p209, %p210
        %p212 = pneg %p211
        // Predicated region
        $region33: #{gcn_edge_concat_parallel.1} parent=31 // pred_check
          _
        $region34: #{gcn_edge_concat_parallel.1} parent=31 // pred_check_branch
          %214 = sbr.rel (%p211) target = $region36
        $region35: #{gcn_edge_concat_parallel.1} parent=31 // pred_region
          %v215 = vld [vmem:[%s2] sm:$0x1]
          %v217 = vlaneseq
          %v218 = vshrl.u32 %v217, 7
          %v219 = vsub.s32 0, %v218
          %v220 = vrot.slane %v215, %v219
          %222 = vst [vmem:[#allocation2] sm:$0xff] %v220
          %223 = vst [vmem:[#allocation2 + $0x8] sm:$0xff] %v220
        $region36: #{gcn_edge_concat_parallel.1} parent=31 // pred_fallthru
          _
        %s224 = smul.u32 %s22, 128
        %s225 = smul.u32 %s21, 128
        %s226 = sadd.s32 %s224, %s225
        %s227 = scalar_lea.vmem %s1, %s226
        %v228 = vld [vmem:[%s227] sm:$0xff]
        %v229 = vld [vmem:[%s227 + $0x8] sm:$0xff]
        %v230 = vld [vmem:[%s227 + $0x10] sm:$0xff]
        %v231 = vld [vmem:[%s227 + $0x18] sm:$0xff]
        %v232 = vld [vmem:[%s227 + $0x20] sm:$0xff]
        %v233 = vld [vmem:[%s227 + $0x28] sm:$0xff]
        %v234 = vld [vmem:[%s227 + $0x30] sm:$0xff]
        %v235 = vld [vmem:[%s227 + $0x38] sm:$0xff]
        %v236 = vld [vmem:[%s227 + $0x40] sm:$0xff]
        %v237 = vld [vmem:[%s227 + $0x48] sm:$0xff]
        %v238 = vld [vmem:[%s227 + $0x50] sm:$0xff]
        %v239 = vld [vmem:[%s227 + $0x58] sm:$0xff]
        %v240 = vld [vmem:[%s227 + $0x60] sm:$0xff]
        %v241 = vld [vmem:[%s227 + $0x68] sm:$0xff]
        %v242 = vld [vmem:[%s227 + $0x70] sm:$0xff]
        %v243 = vld [vmem:[%s227 + $0x78] sm:$0xff]
        %v244 = vld [vmem:[%s206] sm:$0xff]
        %v245 = vld [vmem:[%s206 + $0x8] sm:$0xff]
        %v246 = vld [vmem:[#allocation2] sm:$0xff]
        %v247 = vld [vmem:[#allocation2 + $0x8] sm:$0xff]
        %248 = vmatprep.subr.mxu0 0.0
        %249 = vmatpush1.msra.mxu0 %v243
        %250 = vmatprep.subr.mxu0 0.0
        %251 = vmatpush1.msra.mxu0 %v242
        %252 = vmatprep.subr.mxu0 0.0
        %253 = vmatpush1.msra.mxu0 %v241
        %254 = vmatprep.subr.mxu0 0.0
        %255 = vmatpush1.msra.mxu0 %v240
        %256 = vmatprep.subr.mxu0 0.0
        %257 = vmatpush1.msra.mxu0 %v239
        %258 = vmatprep.subr.mxu0 0.0
        %259 = vmatpush1.msra.mxu0 %v238
        %260 = vmatprep.subr.mxu0 0.0
        %261 = vmatpush1.msra.mxu0 %v237
        %262 = vmatprep.subr.mxu0 0.0
        %263 = vmatpush1.msra.mxu0 %v236
        %264 = vmatprep.subr.mxu0 0.0
        %265 = vmatpush1.msra.mxu0 %v235
        %266 = vmatprep.subr.mxu0 0.0
        %267 = vmatpush1.msra.mxu0 %v234
        %268 = vmatprep.subr.mxu0 0.0
        %269 = vmatpush1.msra.mxu0 %v233
        %270 = vmatprep.subr.mxu0 0.0
        %271 = vmatpush1.msra.mxu0 %v232
        %272 = vmatprep.subr.mxu0 0.0
        %273 = vmatpush1.msra.mxu0 %v231
        %274 = vmatprep.subr.mxu0 0.0
        %275 = vmatpush1.msra.mxu0 %v230
        %276 = vmatprep.subr.mxu0 0.0
        %277 = vmatpush1.msra.mxu0 %v229
        %278 = vmatprep.subr.mxu0 0.0
        %279 = vmatpush1.msra.mxu0 %v228
        %280 = vmatprep.subr.mxu0 0.0
        %281 = vmatpush2.msra.mxu0 0.0
        %282 = vmatprep.subr.mxu0 0.0
        %283 = vmatpush2.msra.mxu0 0.0
        %284 = vmatprep.subr.mxu0 0.0
        %285 = vmatpush2.msra.mxu0 0.0
        %286 = vmatprep.subr.mxu0 0.0
        %287 = vmatpush2.msra.mxu0 0.0
        %288 = vmatprep.subr.mxu0 0.0
        %289 = vmatpush2.msra.mxu0 0.0
        %290 = vmatprep.subr.mxu0 0.0
        %291 = vmatpush2.msra.mxu0 0.0
        %292 = vmatprep.subr.mxu0 0.0
        %293 = vmatpush2.msra.mxu0 0.0
        %294 = vmatprep.subr.mxu0 0.0
        %295 = vmatpush2.msra.mxu0 0.0
        %296 = vmatprep.subr.mxu0 0.0
        %297 = vmatpush2.msra.mxu0 0.0
        %298 = vmatprep.subr.mxu0 0.0
        %299 = vmatpush2.msra.mxu0 0.0
        %300 = vmatprep.subr.mxu0 0.0
        %301 = vmatpush2.msra.mxu0 0.0
        %302 = vmatprep.subr.mxu0 0.0
        %303 = vmatpush2.msra.mxu0 0.0
        %304 = vmatprep.subr.mxu0 0.0
        %305 = vmatpush2.msra.mxu0 0.0
        %306 = vmatprep.subr.mxu0 0.0
        %307 = vmatpush2.msra.mxu0 0.0
        %308 = vmatprep.subr.mxu0 0.0
        %309 = vmatpush2.msra.mxu0 0.0
        %310 = vmatprep.subr.mxu0 0.0
        %311 = vmatpush2.msra.mxu0 0.0
        %312 = vmatprep.mubr.f32.mxu0 0.0
        %313 = vmatmul.mubr.f32.gmra.mxu0 %v244
        %v314 = vpop.f32.mrf.mxu0
        %v315 = vadd.f32 0.0, %v314
        %v316 = vpop.f32.mrf.mxu0
        %317 = vmatprep.mubr.f32.mxu0 0.0
        %318 = vmatmul.mubr.f32.gmra.mxu0 %v245
        %v319 = vpop.f32.mrf.mxu0
        %v320 = vadd.f32 0.0, %v319
        %v321 = vpop.f32.mrf.mxu0
        %322 = vdwg.mxu0
        %v323 = vadd.f32 %v246, %v315
        %v324 = vadd.f32 %v247, %v320
        %325 = vst [vmem:[#allocation2] sm:$0xff] %v323
        %326 = vst [vmem:[#allocation2 + $0x8] sm:$0xff] %v324
        // Predicated region
        $region37: #{gcn_edge_concat_parallel.1} parent=31 // pred_check
          %p327 = pneg %p124
        $region38: #{gcn_edge_concat_parallel.1} parent=31 // pred_check_branch
          %329 = sbr.rel (%p327) target = $region40
        $region39: #{gcn_edge_concat_parallel.1} parent=31 // pred_region
          %s330 = smul.u32 2, %s20
          %s332 = ssub.s32 256, 256
          %333 = vsyncadd [#allocation3], %s332
          %s334 = smul.addr %s330, 128
          %s335 = scalar_lea.hbm %s3, %s334
          %s336 = sshll.u32 [#allocation2], 4
          %s337 = int_to_ptr.vmem [resolvable:$true] %s336
          %342 = dma.vmem_to_hbm [thread:$0]  %s337, 256, %s335, [#allocation3], 128, 128, 8
        $region40: #{gcn_edge_concat_parallel.1} parent=31 // pred_fallthru
          _
        // Predicated region
        $region41: #{gcn_edge_concat_parallel.1} parent=31 // pred_check
          %p343 = pneg %p124
        $region42: #{gcn_edge_concat_parallel.1} parent=31 // pred_check_branch
          %345 = sbr.rel (%p343) target = $region44
        $region43: #{gcn_edge_concat_parallel.1} parent=31 // pred_region
          %346 = dma.done [#allocation3], 256
        $region44: #{gcn_edge_concat_parallel.1} parent=31 // pred_fallthru
          _
      $region32: #{gcn_edge_concat_parallel.1} parent=5 // pred_fallthru
        _
      %p347 = scmp.le.s32.totalorder 2, %s10
      // Predicated region
      $region45: #{gcn_edge_concat_parallel.1} parent=5 // pred_check
        %p348 = pneg %p347
      $region46: #{gcn_edge_concat_parallel.1} parent=5 // pred_check_branch
        %350 = sbr.rel (%p348) target = $region48
      $region47: #{gcn_edge_concat_parallel.1} parent=5 // pred_region
        %s351 = ssub.s32 %s10, 2
      $region48: #{gcn_edge_concat_parallel.1} parent=5 // pred_fallthru
        _
    $region6: #{gcn_edge_concat_parallel.1} parent=1 // loop_footer
      %s14 = sadd.s32 1, %s10
    $region7: #{gcn_edge_concat_parallel.1} parent=1 // loop_footer_branch
      %9 = sbr.rel target = $region3
    $region8: #{gcn_edge_concat_parallel.1} parent=1 // loop_exit
      _
    %352 = vsyncpa [#allocation3], 1
    %s353 = scalar_lea.sflag [#allocation3], 1
    %354 = vsyncpa %s353, 1

</llo_original>
